<compile_context>
chip_gen: v5e
topology: v5e:2x2
jax: 0.10.0
libtpu: 0.0.40
codegen_flags: <defaults>
</compile_context>

<pallas_src>
import jax
import jax.numpy as jnp
from jax.experimental import pallas as pl
from jax.experimental.pallas import tpu as pltpu

LANES = 128                          # vreg lane width (last dim of the slab)
TARGET_TILE_BYTES = 4 << 20          # ~4 MiB per row-tile (sized by bytes)
SINGLE_BLOCK_MAX_BYTES = 512 << 10   # whole-slab block only below this size
SMALL_UNALIGNED_MAX_BYTES = 1 << 20  # unaligned inputs up to 1 MiB: one VMEM block
VMEM_LIMIT_BYTES = 32 << 20          # 4 MiB tiles double-buffered in+out = 16 MiB


def _min_sublanes(dtype) -> int:
    """Minimum sublane multiple for a packed dtype (f32->8, bf16->16, int8->32)."""
    itemsize = jnp.dtype(dtype).itemsize
    return 8 * max(1, 4 // itemsize)


def _scale_kernel(scale_ref, x_ref, o_ref):
    # scale_ref: SMEM (1,) f32 scalar; x_ref / o_ref: VMEM tiles.
    # Cast the scalar to the input dtype so the multiply stays in the input's
    # native precision on the VPU (no-op for f32 inputs).
    s = scale_ref[0].astype(x_ref.dtype)
    o_ref[...] = (x_ref[...] * s).astype(o_ref.dtype)


def scale_forward(x: jax.Array, scale: jax.Array) -> jax.Array:
    """Computes x * scale (scale: shape (1,) f32) with a Pallas TPU kernel.

    Float dtypes assumed (matches the PyTorch module's typical use).
    """
    orig_shape = x.shape
    orig_dtype = x.dtype
    n = x.size
    if n == 0:
        return x

    scale_smem = scale.reshape(1).astype(jnp.float32)
    itemsize = jnp.dtype(orig_dtype).itemsize

    # ---- element count not a multiple of 128: avoid pad/slice HBM passes ----
    if n % LANES != 0:
        if n * itemsize <= SMALL_UNALIGNED_MAX_BYTES:
            # One whole-array block (full-extent block shape, no padding).
            x2d = x.reshape(1, n)
            out = pl.pallas_call(
                _scale_kernel,
                out_shape=jax.ShapeDtypeStruct((1, n), orig_dtype),
                in_specs=[
                    pl.BlockSpec(memory_space=pltpu.MemorySpace.SMEM),
                    pl.BlockSpec(memory_space=pltpu.MemorySpace.VMEM),
                ],
                out_specs=pl.BlockSpec(memory_space=pltpu.MemorySpace.VMEM),
            )(scale_smem, x2d)
            return out.reshape(orig_shape)
        # Large + unaligned: a pad + final slice would add 1-2 extra full HBM
        # passes to a purely bandwidth-bound op; the fused XLA multiply is one
        # read+write pass and therefore strictly faster here.
        return (x * scale_smem[0]).astype(orig_dtype)

    # ---- aligned path: lane-dense (rows, 128) slab, free reshape ------------
    rows = n // LANES
    x2d = x.reshape(rows, LANES)
    sub = _min_sublanes(orig_dtype)
    row_bytes = LANES * itemsize
    slab_bytes = rows * row_bytes

    if slab_bytes <= SINGLE_BLOCK_MAX_BYTES:
        # Small activation: single whole-slab block, zero per-step overhead.
        tr = rows
        grid = (1,)
    else:
        # Tile by bytes (~4 MiB).  Force an even step count >= 2 so the
        # "parallel" grid axis keeps both v7x TensorCores busy and balanced.
        target_tr = max(sub, (TARGET_TILE_BYTES // row_bytes) // sub * sub)
        n_steps = max(2, pl.cdiv(rows, target_tr))
        if n_steps % 2:
            n_steps += 1
        tr = max(sub, pl.cdiv(pl.cdiv(rows, n_steps), sub) * sub)
        grid = (pl.cdiv(rows, tr),)   # ragged last block is masked by Pallas

    out2d = pl.pallas_call(
        _scale_kernel,
        out_shape=jax.ShapeDtypeStruct((rows, LANES), orig_dtype),
        grid=grid,
        in_specs=[
            # scalar parameter lives in SMEM, shared by every grid step
            pl.BlockSpec(memory_space=pltpu.MemorySpace.SMEM),
            pl.BlockSpec((tr, LANES), lambda i: (i, 0)),
        ],
        out_specs=pl.BlockSpec((tr, LANES), lambda i: (i, 0)),
        compiler_params=pltpu.CompilerParams(
            dimension_semantics=("parallel",),   # shard steps across v7x's 2 TCs
            vmem_limit_bytes=VMEM_LIMIT_BYTES,
        ),
    )(scale_smem, x2d)
    return out2d.reshape(orig_shape)


if __name__ == "__main__":
    key = jax.random.PRNGKey(0)

    # Deterministic parameter init (matches nn.Parameter(torch.tensor([1.0]))).
    scale_param = jnp.array([1.0], dtype=jnp.float32)

    # Small NCHW input, consistent with a typical conv-feature-map use of Scale.
    x = jax.random.normal(key, (2, 4, 16, 16), dtype=jnp.float32)
    out = jax.block_until_ready(scale_forward(x, scale_param))
    ref = x * scale_param[0]
    assert out.shape == x.shape and out.dtype == x.dtype
    assert jnp.allclose(out, ref, atol=1e-6, rtol=1e-6)

    # Non-128-aligned shape (whole-array Pallas block, no padding) + non-unit scale.
    k2 = jax.random.PRNGKey(1)
    scale2 = jnp.array([0.37], dtype=jnp.float32)
    x2 = jax.random.normal(k2, (3, 5, 7), dtype=jnp.float32)
    out2 = jax.block_until_ready(scale_forward(x2, scale2))
    assert jnp.allclose(out2, x2 * scale2[0], atol=1e-6, rtol=1e-6)

    # Larger 128-aligned input exercising the tiled path (ragged last row-block).
    k3 = jax.random.PRNGKey(2)
    x3 = jax.random.normal(k3, (1, 8, 600, 300), dtype=jnp.float32)
    out3 = jax.block_until_ready(scale_forward(x3, scale2))
    assert jnp.allclose(out3, x3 * scale2[0], atol=1e-6, rtol=1e-6)

    print("KERNEL_OK")
</pallas_src>

<mosaic_0001>
module attributes {stable_mosaic.version = 11 : i64} {
  func.func @_scale_kernel(%arg0: i32, %arg1: memref<1xf32, #tpu.memory_space<smem>>, %arg2: memref<16x128xf32, #tpu.memory_space<vmem>>, %arg3: memref<16x128xf32, #tpu.memory_space<vmem>>) attributes {dimension_semantics = [#tpu.dimension_semantics<parallel>], iteration_bounds = array<i64: 1>, scalar_prefetch = 0 : i64, scratch_operands = 0 : i64, tpu.core_type = #tpu.core_type<tc>, window_params = [{transform_indices = @transform_0, window_bounds = array<i64: 1>}, {transform_indices = @transform_1, window_bounds = array<i64: 16, 128>}, {transform_indices = @transform_2, window_bounds = array<i64: 16, 128>}]} {
    %c0 = arith.constant 0 : index
    %0 = memref.load %arg1[%c0] : memref<1xf32, #tpu.memory_space<smem>>
    %c0_0 = arith.constant 0 : index
    %c0_1 = arith.constant 0 : index
    %1 = vector.load %arg2[%c0_0, %c0_1] : memref<16x128xf32, #tpu.memory_space<vmem>>, vector<16x128xf32>
    %2 = vector.broadcast %0 : f32 to vector<16x128xf32>
    %3 = arith.mulf %1, %2 : vector<16x128xf32>
    %c0_2 = arith.constant 0 : index
    %c0_3 = arith.constant 0 : index
    %4 = vector.load %arg3[%c0_2, %c0_3] : memref<16x128xf32, #tpu.memory_space<vmem>>, vector<16x128xf32>
    tpu.vector_store %arg3[%c0_2, %c0_3], %3 {strides = array<i32>} : memref<16x128xf32, #tpu.memory_space<vmem>>, vector<16x128xf32>,
    return
  }
  func.func @transform_0(%arg0: i32) -> i32 {
    %c0_i32 = arith.constant 0 : i32
    %c0_i32_0 = arith.constant 0 : i32
    return %c0_i32 : i32
  }
  func.func @transform_1(%arg0: i32) -> (i32, i32) {
    %c0_i32 = arith.constant 0 : i32
    %c0_i32_0 = arith.constant 0 : i32
    return %arg0, %c0_i32 : i32, i32
  }
  func.func @transform_2(%arg0: i32) -> (i32, i32) {
    %c0_i32 = arith.constant 0 : i32
    %c0_i32_0 = arith.constant 0 : i32
    return %arg0, %c0_i32 : i32, i32
  }
}

</mosaic_0001>

<llo_original>
// kernel: tpu_custom_call.1
$region0: #{tpu_custom_call.1}
  #allocation0 [shape = 'u32[]', space=smem, size = 0x4, offset = 0x4, fixed_abs, tag = 'smem constant byte address 0x4 - core index']
  #allocation1 [shape = 'u32[72,128]{1,0:T(1,128)}', space=vmem, size = 0x9000, scoped, tag = 'internal scratch']
  #allocation2 [shape = 'f32[1]{0:T(128)S(6)}', space=smem, size = 0x200, scoped, tag = 'scoped memory for tpu_custom_call.1']
  %s0 = inlined_call_operand.<no memory space> [shape: f32[1], index: 0, kind: input, shape index: {}]
  %s1 = inlined_call_operand.hbm [shape: f32[16,128], index: 1, kind: input, shape index: {}]
  %s2 = inlined_call_operand.hbm [shape: f32[16,128], index: 2, kind: output, shape index: {}]
  %s3 = sld [smem:[#allocation0]]
  $region22: #{tpu_custom_call.1} parent=0
    _
  %s5 = ssub.s32 1, %s3
  %s6 = scalar_select 0, %s5, %s3
  %7 = sst [smem:[#allocation2]] %s0
  $region1: #{tpu_custom_call.1} parent=0
    #allocation3 [shape = 'u8[8192]{0}', space=vmem, size = 0x2000, scoped, tag = 'input window, operand 1, single buffered']
    #allocation4 [shape = 's32[1]{0}', space=sflag, size = 0x4, scoped, tag = 'scoped memory for tpu_custom_call.1']
    #allocation5 [shape = 's32[1]{0}', space=sflag, size = 0x4, scoped, tag = 'scoped memory for tpu_custom_call.1']
    #allocation6 [shape = 'u8[8192]{0}', space=vmem, size = 0x2000, scoped, tag = 'output window, operand 0, single buffered']
    %8 = vsyncpa [#allocation4], 0
    %9 = vsyncpa [#allocation5], 0
    // Predicated region
    $region2: #{tpu_custom_call.1} parent=1 // pred_check
      _
    $region3: #{tpu_custom_call.1} parent=1 // pred_check_branch
      %11 = sbr.rel (0) target = $region5
    $region4: #{tpu_custom_call.1} parent=1 // pred_region
      _
    $region5: #{tpu_custom_call.1} parent=1 // pred_fallthru
      _
    // Predicated region
    $region6: #{tpu_custom_call.1} parent=1 // pred_check
      _
    $region7: #{tpu_custom_call.1} parent=1 // pred_check_branch
      %13 = sbr.rel (0) target = $region9
    $region8: #{tpu_custom_call.1} parent=1 // pred_region
      %15 = vsyncadd [#allocation4], 0
      %s16 = sshll.u32 %s1, 4
      %s17 = int_to_ptr.hbm [resolvable:$true] %s16
      %s18 = sshll.u32 [#allocation3], 4
      %s19 = int_to_ptr.vmem [resolvable:$true] %s18
      %24 = dma.hbm_to_vmem [thread:$0]  %s17, 256, %s19, [#allocation4], 128, 128, 8
    $region9: #{tpu_custom_call.1} parent=1 // pred_fallthru
      _
    // Predicated region
    $region10: #{tpu_custom_call.1} parent=1 // pred_check
      _
    $region11: #{tpu_custom_call.1} parent=1 // pred_check_branch
      %26 = sbr.rel (0) target = $region13
    $region12: #{tpu_custom_call.1} parent=1 // pred_region
      %28 = dma.done [#allocation4], 256
    $region13: #{tpu_custom_call.1} parent=1 // pred_fallthru
      _
    %s29 = sld [smem:[#allocation2]]
    %v30 = vld [vmem:[#allocation3] sm:$0xff]
    %v31 = vld [vmem:[#allocation3 + $0x8] sm:$0xff]
    %v32 = vstv %s29
    %v33 = vmul.f32 %v30, %v32
    %v34 = vmul.f32 %v31, %v32
    %35 = vst [vmem:[#allocation6] sm:$0xff] %v33
    %36 = vst [vmem:[#allocation6 + $0x8] sm:$0xff] %v34
    // Predicated region
    $region14: #{tpu_custom_call.1} parent=1 // pred_check
      _
    $region15: #{tpu_custom_call.1} parent=1 // pred_check_branch
      %38 = sbr.rel (0) target = $region17
    $region16: #{tpu_custom_call.1} parent=1 // pred_region
      %40 = vsyncadd [#allocation5], 0
      %s41 = sshll.u32 [#allocation6], 4
      %s42 = int_to_ptr.vmem [resolvable:$true] %s41
      %s43 = sshll.u32 %s2, 4
      %s44 = int_to_ptr.hbm [resolvable:$true] %s43
      %49 = dma.vmem_to_hbm [thread:$0]  %s42, 256, %s44, [#allocation5], 128, 128, 8
    $region17: #{tpu_custom_call.1} parent=1 // pred_fallthru
      _
    // Predicated region
    $region18: #{tpu_custom_call.1} parent=1 // pred_check
      _
    $region19: #{tpu_custom_call.1} parent=1 // pred_check_branch
      %51 = sbr.rel (0) target = $region21
    $region20: #{tpu_custom_call.1} parent=1 // pred_region
      %53 = dma.done [#allocation5], 256
    $region21: #{tpu_custom_call.1} parent=1 // pred_fallthru
      _
    %54 = vsyncpa [#allocation4], 1
    %55 = vsyncpa [#allocation5], 1

</llo_original>
